<compile_context>
chip_gen: v5e
topology: v5e:2x2
jax: 0.10.0
libtpu: 0.0.40
codegen_flags: <defaults>
</compile_context>

<pallas_src>
import functools

import jax
import jax.numpy as jnp
from jax.experimental import pallas as pl
from jax.experimental.pallas import tpu as pltpu


def _round_up(x, m):
    return ((x + m - 1) // m) * m


# -----------------------------------------------------------------------------
# Pallas kernel: fused embedding MLP + fused actor/critic heads
# -----------------------------------------------------------------------------
def _actor_critic_kernel(
    x_ref,                                              # (bn, D)   bf16
    w1_ref, b1_ref, w2_ref, b2_ref, w3_ref, b3_ref,     # embedding MLP
    wac1_ref, bac1_ref,                                 # fused [actor|critic] fc1
    whead_ref, bhead_ref,                               # fused block-diag fc2 (lane-padded)
    out_ref,                                            # (bn, OUT_PAD) f32
):
    f32 = jnp.float32
    bf16 = jnp.bfloat16

    x = x_ref[...]                                      # bf16 matmul input

    # ---- embedding_net: relu(fc1) -> relu(fc2) -> fc3 (no relu) ----
    h = jnp.dot(x, w1_ref[...], preferred_element_type=f32) + b1_ref[...]
    h = jnp.maximum(h, 0.0)
    h = jnp.dot(h.astype(bf16), w2_ref[...], preferred_element_type=f32) + b2_ref[...]
    h = jnp.maximum(h, 0.0)
    emb = jnp.dot(h.astype(bf16), w3_ref[...], preferred_element_type=f32) + b3_ref[...]

    # ---- fused actor/critic first layers: one (bn,H) x (H,2H) matmul ----
    ac = jnp.dot(emb.astype(bf16), wac1_ref[...], preferred_element_type=f32) + bac1_ref[...]
    ac = jnp.maximum(ac, 0.0)

    # ---- fused lane-dense head: cols [0,A) = actor logits, col A = value ----
    out = jnp.dot(ac.astype(bf16), whead_ref[...], preferred_element_type=f32) + bhead_ref[...]
    out_ref[...] = out.astype(out_ref.dtype)


def _full_spec(shape):
    """BlockSpec covering the full (untiled) array, constant across the grid."""
    ndim = len(shape)
    return pl.BlockSpec(shape, lambda i: (0,) * ndim)


@functools.partial(jax.jit, static_argnames=("block_n",))
def discrete_actor_critic_forward(carry, obs, dones, params, *, block_n=512):
    """JAX/Pallas equivalent of DiscreteActorCritic.forward(_, (obs, dones)).

    Returns (carry, pi_logits, v):
      pi_logits : (T, B, action_dim)  -- logits of the Categorical policy
      v         : (T, B, 1)           -- critic value (single critic)
    `dones` is accepted but unused, matching the PyTorch module.
    """
    del dones  # unused in the reference forward pass
    T, B, D = obs.shape
    N = T * B
    H = params["w1"].shape[1]
    A = params["wa2"].shape[1]
    OUT_PAD = max(128, _round_up(A + 1, 128))           # lane-dense padded head width

    bf16 = jnp.bfloat16
    f32 = jnp.float32

    # Batch tile: large (512 default), but never more than one 128-multiple
    # past N; keep it a multiple of 16 for packed bf16 sublanes.
    bn = min(block_n, _round_up(N, 128))
    bn = _round_up(max(bn, 16), 16)
    grid = (pl.cdiv(N, bn),)

    x = obs.reshape(N, D).astype(bf16)

    # Weights to bf16 (MXU inputs); biases stay f32 (VPU epilogue).
    w1 = params["w1"].astype(bf16); b1 = params["b1"].astype(f32)
    w2 = params["w2"].astype(bf16); b2 = params["b2"].astype(f32)
    w3 = params["w3"].astype(bf16); b3 = params["b3"].astype(f32)

    # Fused actor|critic first layers: (H, 2H) weight, (1, 2H) bias.
    wac1 = jnp.concatenate([params["wa1"], params["wc1"]], axis=1).astype(bf16)
    bac1 = jnp.concatenate([params["ba1"], params["bc1"]], axis=1).astype(f32)

    # Fused block-diagonal, zero-padded head: cols [0,A) actor, col A critic.
    whead = jnp.zeros((2 * H, OUT_PAD), bf16)
    whead = whead.at[:H, :A].set(params["wa2"].astype(bf16))
    whead = whead.at[H:, A:A + 1].set(params["wc2"].astype(bf16))
    bhead = jnp.zeros((1, OUT_PAD), f32)
    bhead = bhead.at[:, :A].set(params["ba2"].astype(f32))
    bhead = bhead.at[:, A:A + 1].set(params["bc2"].astype(f32))

    in_specs = [
        pl.BlockSpec((bn, D), lambda i: (i, 0)),        # obs rows (tiled)
        _full_spec(w1.shape), _full_spec(b1.shape),
        _full_spec(w2.shape), _full_spec(b2.shape),
        _full_spec(w3.shape), _full_spec(b3.shape),
        _full_spec(wac1.shape), _full_spec(bac1.shape),
        _full_spec(whead.shape), _full_spec(bhead.shape),
    ]
    out_specs = pl.BlockSpec((bn, OUT_PAD), lambda i: (i, 0))
    out_shape = jax.ShapeDtypeStruct((N, OUT_PAD), f32)

    # Advisory cost estimate for the XLA scheduler.
    flops = 2 * N * (D * H + 2 * H * H + H * (2 * H) + (2 * H) * OUT_PAD)
    bytes_accessed = (
        N * D * 2                                        # bf16 inputs
        + N * OUT_PAD * 4                                # f32 outputs
        + (D * H + 2 * H * H + H * 2 * H + 2 * H * OUT_PAD) * 2   # bf16 weights
        + (5 * H + OUT_PAD) * 4                          # f32 biases
    )
    cost = pl.CostEstimate(flops=flops, transcendentals=0,
                           bytes_accessed=bytes_accessed)

    out_flat = pl.pallas_call(
        _actor_critic_kernel,
        grid=grid,
        in_specs=in_specs,
        out_specs=out_specs,
        out_shape=out_shape,
        compiler_params=pltpu.CompilerParams(
            dimension_semantics=("parallel",),
        ),
        cost_estimate=cost,
    )(x, w1, b1, w2, b2, w3, b3, wac1, bac1, whead, bhead)

    pi_logits = out_flat[:, :A].reshape(T, B, A)
    # single critic: critic(emb) -> (T,B,1); .unsqueeze(2).squeeze(-1) -> (T,B,1)
    v = out_flat[:, A:A + 1].reshape(T, B, 1)
    return carry, pi_logits, v


# -----------------------------------------------------------------------------
# Deterministic parameter initialization (mirrors the PyTorch __init__ shapes)
# -----------------------------------------------------------------------------
def init_params(key, input_size, action_dim, hidden_size):
    """Orthogonal init with the same scales as the PyTorch module, zero biases.

    Weights are stored already transposed to (in_features, out_features).
    """
    def ortho(key, fan_in, fan_out, scale):
        return jax.nn.initializers.orthogonal(scale=scale)(
            key, (fan_in, fan_out), jnp.float32
        )

    keys = jax.random.split(key, 7)
    H, D, A = hidden_size, input_size, action_dim
    params = {
        # embedding_net (SimpleNN)
        "w1": ortho(keys[0], D, H, 2.0),  "b1": jnp.zeros((1, H), jnp.float32),
        "w2": ortho(keys[1], H, H, 0.01), "b2": jnp.zeros((1, H), jnp.float32),
        "w3": ortho(keys[2], H, H, 0.01), "b3": jnp.zeros((1, H), jnp.float32),
        # actor (DiscreteActor) -- fc1 is Linear(input_size, hidden) but is fed
        # the embedding, so the module only works when input_size == hidden_size
        "wa1": ortho(keys[3], D, H, 2.0),  "ba1": jnp.zeros((1, H), jnp.float32),
        "wa2": ortho(keys[4], H, A, 0.01), "ba2": jnp.zeros((1, A), jnp.float32),
        # critic (single critic, double_critic=False)
        "wc1": ortho(keys[5], D, H, 2.0), "bc1": jnp.zeros((1, H), jnp.float32),
        "wc2": ortho(keys[6], H, 1, 1.0), "bc2": jnp.zeros((1, 1), jnp.float32),
    }
    return params


# -----------------------------------------------------------------------------
# Pure-JAX references for correctness checks
# -----------------------------------------------------------------------------
def _reference_forward_bf16(carry, obs, params):
    """Replicates the kernel's bf16-matmul / f32-accumulate numerics."""
    T, B, D = obs.shape
    bf16, f32 = jnp.bfloat16, jnp.float32

    def mm(a, w):
        return jnp.dot(a.astype(bf16), w.astype(bf16), preferred_element_type=f32)

    x = obs.reshape(T * B, D)
    h = jax.nn.relu(mm(x, params["w1"]) + params["b1"])
    h = jax.nn.relu(mm(h, params["w2"]) + params["b2"])
    emb = mm(h, params["w3"]) + params["b3"]
    a = jax.nn.relu(mm(emb, params["wa1"]) + params["ba1"])
    logits = mm(a, params["wa2"]) + params["ba2"]
    c = jax.nn.relu(mm(emb, params["wc1"]) + params["bc1"])
    v = mm(c, params["wc2"]) + params["bc2"]
    A = logits.shape[-1]
    return carry, logits.reshape(T, B, A), v.reshape(T, B, 1)


def _reference_forward_f32(carry, obs, params):
    T, B, D = obs.shape
    x = obs.reshape(T * B, D)
    h = jax.nn.relu(x @ params["w1"] + params["b1"])
    h = jax.nn.relu(h @ params["w2"] + params["b2"])
    emb = h @ params["w3"] + params["b3"]
    a = jax.nn.relu(emb @ params["wa1"] + params["ba1"])
    logits = a @ params["wa2"] + params["ba2"]
    c = jax.nn.relu(emb @ params["wc1"] + params["bc1"])
    v = c @ params["wc2"] + params["bc2"]
    A = logits.shape[-1]
    return carry, logits.reshape(T, B, A), v.reshape(T, B, 1)


if __name__ == "__main__":
    # NOTE: the PyTorch module feeds the hidden-size embedding into heads built
    # with `input_size` fan-in, so it only runs when input_size == hidden_size.
    T, B = 4, 2                 # seq length, batch
    INPUT_SIZE = 32             # == HIDDEN_SIZE (required by the module itself)
    HIDDEN_SIZE = 32
    ACTION_DIM = 8

    key = jax.random.PRNGKey(0)
    k_obs, k_params = jax.random.split(key)

    obs = jax.random.normal(k_obs, (T, B, INPUT_SIZE), dtype=jnp.float32)
    dones = jnp.zeros((T, B), dtype=jnp.float32)            # unused, as in PyTorch
    carry = jnp.zeros((B, HIDDEN_SIZE), dtype=jnp.float32)  # passed-through `_`

    params = init_params(k_params, INPUT_SIZE, ACTION_DIM, HIDDEN_SIZE)

    carry_out, pi_logits, v = discrete_actor_critic_forward(
        carry, obs, dones, params
    )
    jax.block_until_ready((carry_out, pi_logits, v))

    # tight check against a reference using the same bf16/f32 mixed precision
    _, ref_logits, ref_v = _reference_forward_bf16(carry, obs, params)
    # loose semantic check against the pure-f32 reference
    _, f32_logits, f32_v = _reference_forward_f32(carry, obs, params)

    assert pi_logits.shape == (T, B, ACTION_DIM)
    assert v.shape == (T, B, 1)
    assert jnp.allclose(pi_logits, ref_logits, atol=1e-4, rtol=1e-2)
    assert jnp.allclose(v, ref_v, atol=1e-4, rtol=1e-2)
    assert jnp.allclose(pi_logits, f32_logits, atol=1e-2, rtol=1e-1)
    assert jnp.allclose(v, f32_v, atol=1e-2, rtol=1e-1)

    print("KERNEL_OK")
</pallas_src>

<mosaic_0001>
module attributes {stable_mosaic.version = 11 : i64} {
  func.func @_actor_critic_kernel(%arg0: i32, %arg1: memref<128x32xbf16, #tpu.memory_space<vmem>>, %arg2: memref<32x32xbf16, #tpu.memory_space<vmem>>, %arg3: memref<1x32xf32, #tpu.memory_space<vmem>>, %arg4: memref<32x32xbf16, #tpu.memory_space<vmem>>, %arg5: memref<1x32xf32, #tpu.memory_space<vmem>>, %arg6: memref<32x32xbf16, #tpu.memory_space<vmem>>, %arg7: memref<1x32xf32, #tpu.memory_space<vmem>>, %arg8: memref<32x64xbf16, #tpu.memory_space<vmem>>, %arg9: memref<1x64xf32, #tpu.memory_space<vmem>>, %arg10: memref<64x128xbf16, #tpu.memory_space<vmem>>, %arg11: memref<1x128xf32, #tpu.memory_space<vmem>>, %arg12: memref<128x128xf32, #tpu.memory_space<vmem>>) attributes {dimension_semantics = [#tpu.dimension_semantics<parallel>], iteration_bounds = array<i64: 1>, scalar_prefetch = 0 : i64, scratch_operands = 0 : i64, tpu.core_type = #tpu.core_type<tc>, window_params = [{transform_indices = @transform_0, window_bounds = array<i64: 128, 32>}, {pipeline_mode = #tpu.pipeline_mode<synchronous>, transform_indices = @transform_1, window_bounds = array<i64: 32, 32>}, {pipeline_mode = #tpu.pipeline_mode<synchronous>, transform_indices = @transform_2, window_bounds = array<i64: 1, 32>}, {pipeline_mode = #tpu.pipeline_mode<synchronous>, transform_indices = @transform_3, window_bounds = array<i64: 32, 32>}, {pipeline_mode = #tpu.pipeline_mode<synchronous>, transform_indices = @transform_4, window_bounds = array<i64: 1, 32>}, {pipeline_mode = #tpu.pipeline_mode<synchronous>, transform_indices = @transform_5, window_bounds = array<i64: 32, 32>}, {pipeline_mode = #tpu.pipeline_mode<synchronous>, transform_indices = @transform_6, window_bounds = array<i64: 1, 32>}, {pipeline_mode = #tpu.pipeline_mode<synchronous>, transform_indices = @transform_7, window_bounds = array<i64: 32, 64>}, {pipeline_mode = #tpu.pipeline_mode<synchronous>, transform_indices = @transform_8, window_bounds = array<i64: 1, 64>}, {pipeline_mode = #tpu.pipeline_mode<synchronous>, transform_indices = @transform_9, window_bounds = array<i64: 64, 128>}, {pipeline_mode = #tpu.pipeline_mode<synchronous>, transform_indices = @transform_10, window_bounds = array<i64: 1, 128>}, {transform_indices = @transform_11, window_bounds = array<i64: 128, 128>}]} {
    %c0 = arith.constant 0 : index
    %c0_0 = arith.constant 0 : index
    %0 = vector.load %arg1[%c0, %c0_0] : memref<128x32xbf16, #tpu.memory_space<vmem>>, vector<128x32xbf16>
    %c0_1 = arith.constant 0 : index
    %c0_2 = arith.constant 0 : index
    %1 = vector.load %arg2[%c0_1, %c0_2] : memref<32x32xbf16, #tpu.memory_space<vmem>>, vector<32x32xbf16>
    %cst = arith.constant dense<0.000000e+00> : vector<128x32xf32>
    %2 = tpu.matmul %0, %1, %cst {dimension_numbers = #tpu.dot_dimension_numbers<[1], [0], [0], [1], [0, 0, 1, 1], [], []>} : vector<128x32xbf16>, vector<32x32xbf16>, vector<128x32xf32> -> vector<128x32xf32>
    %c0_3 = arith.constant 0 : index
    %c0_4 = arith.constant 0 : index
    %3 = vector.load %arg3[%c0_3, %c0_4] : memref<1x32xf32, #tpu.memory_space<vmem>>, vector<1x32xf32>
    %4 = vector.broadcast %3 : vector<1x32xf32> to vector<128x32xf32>
    %5 = arith.addf %2, %4 : vector<128x32xf32>
    %cst_5 = arith.constant 0.000000e+00 : f32
    %6 = vector.broadcast %cst_5 : f32 to vector<128x32xf32>
    %7 = arith.maximumf %5, %6 : vector<128x32xf32>
    %8 = arith.truncf %7 : vector<128x32xf32> to vector<128x32xbf16>
    %c0_6 = arith.constant 0 : index
    %c0_7 = arith.constant 0 : index
    %9 = vector.load %arg4[%c0_6, %c0_7] : memref<32x32xbf16, #tpu.memory_space<vmem>>, vector<32x32xbf16>
    %cst_8 = arith.constant dense<0.000000e+00> : vector<128x32xf32>
    %10 = tpu.matmul %8, %9, %cst_8 {dimension_numbers = #tpu.dot_dimension_numbers<[1], [0], [0], [1], [0, 0, 1, 1], [], []>} : vector<128x32xbf16>, vector<32x32xbf16>, vector<128x32xf32> -> vector<128x32xf32>
    %c0_9 = arith.constant 0 : index
    %c0_10 = arith.constant 0 : index
    %11 = vector.load %arg5[%c0_9, %c0_10] : memref<1x32xf32, #tpu.memory_space<vmem>>, vector<1x32xf32>
    %12 = vector.broadcast %11 : vector<1x32xf32> to vector<128x32xf32>
    %13 = arith.addf %10, %12 : vector<128x32xf32>
    %cst_11 = arith.constant 0.000000e+00 : f32
    %14 = vector.broadcast %cst_11 : f32 to vector<128x32xf32>
    %15 = arith.maximumf %13, %14 : vector<128x32xf32>
    %16 = arith.truncf %15 : vector<128x32xf32> to vector<128x32xbf16>
    %c0_12 = arith.constant 0 : index
    %c0_13 = arith.constant 0 : index
    %17 = vector.load %arg6[%c0_12, %c0_13] : memref<32x32xbf16, #tpu.memory_space<vmem>>, vector<32x32xbf16>
    %cst_14 = arith.constant dense<0.000000e+00> : vector<128x32xf32>
    %18 = tpu.matmul %16, %17, %cst_14 {dimension_numbers = #tpu.dot_dimension_numbers<[1], [0], [0], [1], [0, 0, 1, 1], [], []>} : vector<128x32xbf16>, vector<32x32xbf16>, vector<128x32xf32> -> vector<128x32xf32>
    %c0_15 = arith.constant 0 : index
    %c0_16 = arith.constant 0 : index
    %19 = vector.load %arg7[%c0_15, %c0_16] : memref<1x32xf32, #tpu.memory_space<vmem>>, vector<1x32xf32>
    %20 = vector.broadcast %19 : vector<1x32xf32> to vector<128x32xf32>
    %21 = arith.addf %18, %20 : vector<128x32xf32>
    %22 = arith.truncf %21 : vector<128x32xf32> to vector<128x32xbf16>
    %c0_17 = arith.constant 0 : index
    %c0_18 = arith.constant 0 : index
    %23 = vector.load %arg8[%c0_17, %c0_18] : memref<32x64xbf16, #tpu.memory_space<vmem>>, vector<32x64xbf16>
    %cst_19 = arith.constant dense<0.000000e+00> : vector<128x64xf32>
    %24 = tpu.matmul %22, %23, %cst_19 {dimension_numbers = #tpu.dot_dimension_numbers<[1], [0], [0], [1], [0, 0, 1, 1], [], []>} : vector<128x32xbf16>, vector<32x64xbf16>, vector<128x64xf32> -> vector<128x64xf32>
    %c0_20 = arith.constant 0 : index
    %c0_21 = arith.constant 0 : index
    %25 = vector.load %arg9[%c0_20, %c0_21] : memref<1x64xf32, #tpu.memory_space<vmem>>, vector<1x64xf32>
    %26 = vector.broadcast %25 : vector<1x64xf32> to vector<128x64xf32>
    %27 = arith.addf %24, %26 : vector<128x64xf32>
    %cst_22 = arith.constant 0.000000e+00 : f32
    %28 = vector.broadcast %cst_22 : f32 to vector<128x64xf32>
    %29 = arith.maximumf %27, %28 : vector<128x64xf32>
    %30 = arith.truncf %29 : vector<128x64xf32> to vector<128x64xbf16>
    %c0_23 = arith.constant 0 : index
    %c0_24 = arith.constant 0 : index
    %31 = vector.load %arg10[%c0_23, %c0_24] : memref<64x128xbf16, #tpu.memory_space<vmem>>, vector<64x128xbf16>
    %cst_25 = arith.constant dense<0.000000e+00> : vector<128x128xf32>
    %32 = tpu.matmul %30, %31, %cst_25 {dimension_numbers = #tpu.dot_dimension_numbers<[1], [0], [0], [1], [0, 0, 1, 1], [], []>} : vector<128x64xbf16>, vector<64x128xbf16>, vector<128x128xf32> -> vector<128x128xf32>
    %c0_26 = arith.constant 0 : index
    %c0_27 = arith.constant 0 : index
    %33 = vector.load %arg11[%c0_26, %c0_27] : memref<1x128xf32, #tpu.memory_space<vmem>>, vector<1x128xf32>
    %34 = vector.broadcast %33 : vector<1x128xf32> to vector<128x128xf32>
    %35 = arith.addf %32, %34 : vector<128x128xf32>
    %c0_28 = arith.constant 0 : index
    %c0_29 = arith.constant 0 : index
    %36 = vector.load %arg12[%c0_28, %c0_29] : memref<128x128xf32, #tpu.memory_space<vmem>>, vector<128x128xf32>
    tpu.vector_store %arg12[%c0_28, %c0_29], %35 {strides = array<i32>} : memref<128x128xf32, #tpu.memory_space<vmem>>, vector<128x128xf32>,
    return
  }
  func.func @transform_0(%arg0: i32) -> (i32, i32) {
    %c0_i32 = arith.constant 0 : i32
    %c0_i32_0 = arith.constant 0 : i32
    return %arg0, %c0_i32 : i32, i32
  }
  func.func @transform_1(%arg0: i32) -> (i32, i32) {
    %c0_i32 = arith.constant 0 : i32
    %c0_i32_0 = arith.constant 0 : i32
    %c0_i32_1 = arith.constant 0 : i32
    return %c0_i32, %c0_i32_0 : i32, i32
  }
  func.func @transform_2(%arg0: i32) -> (i32, i32) {
    %c0_i32 = arith.constant 0 : i32
    %c0_i32_0 = arith.constant 0 : i32
    %c0_i32_1 = arith.constant 0 : i32
    return %c0_i32, %c0_i32_0 : i32, i32
  }
  func.func @transform_3(%arg0: i32) -> (i32, i32) {
    %c0_i32 = arith.constant 0 : i32
    %c0_i32_0 = arith.constant 0 : i32
    %c0_i32_1 = arith.constant 0 : i32
    return %c0_i32, %c0_i32_0 : i32, i32
  }
  func.func @transform_4(%arg0: i32) -> (i32, i32) {
    %c0_i32 = arith.constant 0 : i32
    %c0_i32_0 = arith.constant 0 : i32
    %c0_i32_1 = arith.constant 0 : i32
    return %c0_i32, %c0_i32_0 : i32, i32
  }
  func.func @transform_5(%arg0: i32) -> (i32, i32) {
    %c0_i32 = arith.constant 0 : i32
    %c0_i32_0 = arith.constant 0 : i32
    %c0_i32_1 = arith.constant 0 : i32
    return %c0_i32, %c0_i32_0 : i32, i32
  }
  func.func @transform_6(%arg0: i32) -> (i32, i32) {
    %c0_i32 = arith.constant 0 : i32
    %c0_i32_0 = arith.constant 0 : i32
    %c0_i32_1 = arith.constant 0 : i32
    return %c0_i32, %c0_i32_0 : i32, i32
  }
  func.func @transform_7(%arg0: i32) -> (i32, i32) {
    %c0_i32 = arith.constant 0 : i32
    %c0_i32_0 = arith.constant 0 : i32
    %c0_i32_1 = arith.constant 0 : i32
    return %c0_i32, %c0_i32_0 : i32, i32
  }
  func.func @transform_8(%arg0: i32) -> (i32, i32) {
    %c0_i32 = arith.constant 0 : i32
    %c0_i32_0 = arith.constant 0 : i32
    %c0_i32_1 = arith.constant 0 : i32
    return %c0_i32, %c0_i32_0 : i32, i32
  }
  func.func @transform_9(%arg0: i32) -> (i32, i32) {
    %c0_i32 = arith.constant 0 : i32
    %c0_i32_0 = arith.constant 0 : i32
    %c0_i32_1 = arith.constant 0 : i32
    return %c0_i32, %c0_i32_0 : i32, i32
  }
  func.func @transform_10(%arg0: i32) -> (i32, i32) {
    %c0_i32 = arith.constant 0 : i32
    %c0_i32_0 = arith.constant 0 : i32
    %c0_i32_1 = arith.constant 0 : i32
    return %c0_i32, %c0_i32_0 : i32, i32
  }
  func.func @transform_11(%arg0: i32) -> (i32, i32) {
    %c0_i32 = arith.constant 0 : i32
    %c0_i32_0 = arith.constant 0 : i32
    return %arg0, %c0_i32 : i32, i32
  }
}

</mosaic_0001>

<llo_original>
// kernel: discrete_actor_critic_forward.1
$region0: #{discrete_actor_critic_forward.1}
  #allocation0 [shape = 'u32[]', space=smem, size = 0x4, offset = 0x4, fixed_abs, tag = 'smem constant byte address 0x4 - core index']
  #allocation1 [shape = 'u32[72,128]{1,0:T(1,128)}', space=vmem, size = 0x9000, scoped, tag = 'internal scratch']
  %s0 = inlined_call_operand.vmem [shape: bf16[8,32], index: 0, kind: input, shape index: {}]
  %s1 = inlined_call_operand.vmem [shape: bf16[32,32], index: 1, kind: input, shape index: {}]
  %s2 = inlined_call_operand.vmem [shape: f32[1,32], index: 2, kind: input, shape index: {}]
  %s3 = inlined_call_operand.vmem [shape: bf16[32,32], index: 3, kind: input, shape index: {}]
  %s4 = inlined_call_operand.vmem [shape: f32[1,32], index: 4, kind: input, shape index: {}]
  %s5 = inlined_call_operand.vmem [shape: bf16[32,32], index: 5, kind: input, shape index: {}]
  %s6 = inlined_call_operand.vmem [shape: f32[1,32], index: 6, kind: input, shape index: {}]
  %s7 = inlined_call_operand.vmem [shape: bf16[32,64], index: 7, kind: input, shape index: {}]
  %s8 = inlined_call_operand.vmem [shape: f32[1,64], index: 8, kind: input, shape index: {}]
  %s9 = inlined_call_operand.vmem [shape: bf16[64,128], index: 9, kind: input, shape index: {}]
  %s10 = inlined_call_operand.vmem [shape: f32[1,128], index: 10, kind: input, shape index: {}]
  %s11 = inlined_call_operand.vmem [shape: f32[8,128], index: 11, kind: output, shape index: {}]
  %s12 = sld [smem:[#allocation0]]
  $region88: #{discrete_actor_critic_forward.1} parent=0
    _
  %s14 = ssub.s32 1, %s12
  %s15 = scalar_select 0, %s14, %s12
  $region1: #{discrete_actor_critic_forward.1} parent=0
    #allocation2 [shape = 'u8[65536]{0}', space=vmem, size = 0x10000, scoped, tag = 'output window, operand 0, single buffered']
    // Predicated region
    $region2: #{discrete_actor_critic_forward.1} parent=1 // pred_check
      _
    $region3: #{discrete_actor_critic_forward.1} parent=1 // pred_check_branch
      %17 = sbr.rel (0) target = $region5
    $region4: #{discrete_actor_critic_forward.1} parent=1 // pred_region
      _
    $region5: #{discrete_actor_critic_forward.1} parent=1 // pred_fallthru
      _
    // Predicated region
    $region6: #{discrete_actor_critic_forward.1} parent=1 // pred_check
      _
    $region7: #{discrete_actor_critic_forward.1} parent=1 // pred_check_branch
      %19 = sbr.rel (0) target = $region9
    $region8: #{discrete_actor_critic_forward.1} parent=1 // pred_region
      _
    $region9: #{discrete_actor_critic_forward.1} parent=1 // pred_fallthru
      _
    // Predicated region
    $region10: #{discrete_actor_critic_forward.1} parent=1 // pred_check
      _
    $region11: #{discrete_actor_critic_forward.1} parent=1 // pred_check_branch
      %21 = sbr.rel (0) target = $region13
    $region12: #{discrete_actor_critic_forward.1} parent=1 // pred_region
      _
    $region13: #{discrete_actor_critic_forward.1} parent=1 // pred_fallthru
      _
    // Predicated region
    $region14: #{discrete_actor_critic_forward.1} parent=1 // pred_check
      _
    $region15: #{discrete_actor_critic_forward.1} parent=1 // pred_check_branch
      %23 = sbr.rel (0) target = $region17
    $region16: #{discrete_actor_critic_forward.1} parent=1 // pred_region
      _
    $region17: #{discrete_actor_critic_forward.1} parent=1 // pred_fallthru
      _
    // Predicated region
    $region18: #{discrete_actor_critic_forward.1} parent=1 // pred_check
      _
    $region19: #{discrete_actor_critic_forward.1} parent=1 // pred_check_branch
      %25 = sbr.rel (0) target = $region21
    $region20: #{discrete_actor_critic_forward.1} parent=1 // pred_region
      _
    $region21: #{discrete_actor_critic_forward.1} parent=1 // pred_fallthru
      _
    // Predicated region
    $region22: #{discrete_actor_critic_forward.1} parent=1 // pred_check
      _
    $region23: #{discrete_actor_critic_forward.1} parent=1 // pred_check_branch
      %27 = sbr.rel (0) target = $region25
    $region24: #{discrete_actor_critic_forward.1} parent=1 // pred_region
      _
    $region25: #{discrete_actor_critic_forward.1} parent=1 // pred_fallthru
      _
    // Predicated region
    $region26: #{discrete_actor_critic_forward.1} parent=1 // pred_check
      _
    $region27: #{discrete_actor_critic_forward.1} parent=1 // pred_check_branch
      %29 = sbr.rel (0) target = $region29
    $region28: #{discrete_actor_critic_forward.1} parent=1 // pred_region
      _
    $region29: #{discrete_actor_critic_forward.1} parent=1 // pred_fallthru
      _
    // Predicated region
    $region30: #{discrete_actor_critic_forward.1} parent=1 // pred_check
      _
    $region31: #{discrete_actor_critic_forward.1} parent=1 // pred_check_branch
      %31 = sbr.rel (0) target = $region33
    $region32: #{discrete_actor_critic_forward.1} parent=1 // pred_region
      _
    $region33: #{discrete_actor_critic_forward.1} parent=1 // pred_fallthru
      _
    // Predicated region
    $region34: #{discrete_actor_critic_forward.1} parent=1 // pred_check
      _
    $region35: #{discrete_actor_critic_forward.1} parent=1 // pred_check_branch
      %33 = sbr.rel (0) target = $region37
    $region36: #{discrete_actor_critic_forward.1} parent=1 // pred_region
      _
    $region37: #{discrete_actor_critic_forward.1} parent=1 // pred_fallthru
      _
    // Predicated region
    $region38: #{discrete_actor_critic_forward.1} parent=1 // pred_check
      _
    $region39: #{discrete_actor_critic_forward.1} parent=1 // pred_check_branch
      %35 = sbr.rel (0) target = $region41
    $region40: #{discrete_actor_critic_forward.1} parent=1 // pred_region
      _
    $region41: #{discrete_actor_critic_forward.1} parent=1 // pred_fallthru
      _
    // Predicated region
    $region42: #{discrete_actor_critic_forward.1} parent=1 // pred_check
      _
    $region43: #{discrete_actor_critic_forward.1} parent=1 // pred_check_branch
      %37 = sbr.rel (0) target = $region45
    $region44: #{discrete_actor_critic_forward.1} parent=1 // pred_region
      _
    $region45: #{discrete_actor_critic_forward.1} parent=1 // pred_fallthru
      _
    %v39 = vld [vmem:[%s0] sm:$0xf]
    %v40 = vld [vmem:[%s0 + $0x4] sm:$0xf]
    %v41 = vld [vmem:[%s0 + $0x8] sm:$0xf]
    %v42 = vld [vmem:[%s0 + $0xc] sm:$0xf]
    %v43 = vld [vmem:[%s0 + $0x10] sm:$0xf]
    %v44 = vld [vmem:[%s0 + $0x14] sm:$0xf]
    %v45 = vld [vmem:[%s0 + $0x18] sm:$0xf]
    %v46 = vld [vmem:[%s0 + $0x1c] sm:$0xf]
    %v47 = vld [vmem:[%s0 + $0x20] sm:$0xf]
    %v48 = vld [vmem:[%s0 + $0x24] sm:$0xf]
    %v49 = vld [vmem:[%s0 + $0x28] sm:$0xf]
    %v50 = vld [vmem:[%s0 + $0x2c] sm:$0xf]
    %v51 = vld [vmem:[%s0 + $0x30] sm:$0xf]
    %v52 = vld [vmem:[%s0 + $0x34] sm:$0xf]
    %v53 = vld [vmem:[%s0 + $0x38] sm:$0xf]
    %v54 = vld [vmem:[%s0 + $0x3c] sm:$0xf]
    %v55 = vld [vmem:[%s1] sm:$0xf]
    %v56 = vld [vmem:[%s1 + $0x4] sm:$0xf]
    %v57 = vld [vmem:[%s1 + $0x8] sm:$0xf]
    %v58 = vld [vmem:[%s1 + $0xc] sm:$0xf]
    %v59 = vld [vmem:[%s2] sm:$0x1]
    %v61 = vperm.slane %v59, 0
    %v79 = vunpack.c.l.b16 %v39
    %v80 = vunpack.c.l.b16 %v40
    %v81 = vunpack.c.l.b16 %v41
    %v82 = vunpack.c.l.b16 %v42
    %v83 = vunpack.c.l.b16 %v43
    %v84 = vunpack.c.l.b16 %v44
    %v85 = vunpack.c.l.b16 %v45
    %v86 = vunpack.c.l.b16 %v46
    %v87 = vunpack.c.l.b16 %v47
    %v88 = vunpack.c.l.b16 %v48
    %v89 = vunpack.c.l.b16 %v49
    %v90 = vunpack.c.l.b16 %v50
    %v91 = vunpack.c.l.b16 %v51
    %v92 = vunpack.c.l.b16 %v52
    %v93 = vunpack.c.l.b16 %v53
    %v94 = vunpack.c.l.b16 %v54
    %v95 = vpack.c.b16 %v80, %v79
    %v96 = vpack.c.b16 %v82, %v81
    %v97 = vpack.c.b16 %v84, %v83
    %v98 = vpack.c.b16 %v86, %v85
    %v99 = vpack.c.b16 %v88, %v87
    %v100 = vpack.c.b16 %v90, %v89
    %v101 = vpack.c.b16 %v92, %v91
    %v102 = vpack.c.b16 %v94, %v93
    %v107 = vunpack.c.l.b16 %v55
    %v108 = vunpack.c.l.b16 %v56
    %v109 = vunpack.c.l.b16 %v57
    %v110 = vunpack.c.l.b16 %v58
    %v111 = vpack.c.b16 %v108, %v107
    %v112 = vpack.c.b16 %v110, %v109
    %vm115 = vcmask 261120
    %v117 = vsel %vm115, %v95, 0
    %v120 = vsel %vm115, %v96, 0
    %v123 = vsel %vm115, %v97, 0
    %v126 = vsel %vm115, %v98, 0
    %v129 = vsel %vm115, %v99, 0
    %v132 = vsel %vm115, %v100, 0
    %v135 = vsel %vm115, %v101, 0
    %v138 = vsel %vm115, %v102, 0
    %140 = vmatpush.bf16.msra.mxu0 0
    %141 = vmatpush.bf16.msra.mxu0 0
    %142 = vmatpush.bf16.msra.mxu0 0
    %143 = vmatpush.bf16.msra.mxu0 0
    %144 = vmatpush.bf16.msra.mxu0 0
    %145 = vmatpush.bf16.msra.mxu0 0
    %146 = vmatpush.bf16.msra.mxu0 %v112
    %147 = vmatpush.bf16.msra.mxu0 %v111
    %148 = vmatmul.bf16.gmra.mxu0 %v117
    %v149 = vpop.f32.mrf.mxu0
    %v150 = vadd.f32 %v61, %v149
    %v151 = vpop.f32.mrf.mxu0
    %v152 = vadd.f32 %v61, %v151
    %153 = vmatmul.bf16.gmra.mxu0 %v120
    %v154 = vpop.f32.mrf.mxu0
    %v155 = vadd.f32 %v61, %v154
    %v156 = vpop.f32.mrf.mxu0
    %v157 = vadd.f32 %v61, %v156
    %158 = vmatmul.bf16.gmra.mxu0 %v123
    %v159 = vpop.f32.mrf.mxu0
    %v160 = vadd.f32 %v61, %v159
    %v161 = vpop.f32.mrf.mxu0
    %v162 = vadd.f32 %v61, %v161
    %163 = vmatmul.bf16.gmra.mxu0 %v126
    %v164 = vpop.f32.mrf.mxu0
    %v165 = vadd.f32 %v61, %v164
    %v166 = vpop.f32.mrf.mxu0
    %v167 = vadd.f32 %v61, %v166
    %168 = vmatmul.bf16.gmra.mxu0 %v129
    %v169 = vpop.f32.mrf.mxu0
    %v170 = vadd.f32 %v61, %v169
    %v171 = vpop.f32.mrf.mxu0
    %v172 = vadd.f32 %v61, %v171
    %173 = vmatmul.bf16.gmra.mxu0 %v132
    %v174 = vpop.f32.mrf.mxu0
    %v175 = vadd.f32 %v61, %v174
    %v176 = vpop.f32.mrf.mxu0
    %v177 = vadd.f32 %v61, %v176
    %178 = vmatmul.bf16.gmra.mxu0 %v135
    %v179 = vpop.f32.mrf.mxu0
    %v180 = vadd.f32 %v61, %v179
    %v181 = vpop.f32.mrf.mxu0
    %v182 = vadd.f32 %v61, %v181
    %183 = vmatmul.bf16.gmra.mxu0 %v138
    %v184 = vpop.f32.mrf.mxu0
    %v185 = vadd.f32 %v61, %v184
    %v186 = vpop.f32.mrf.mxu0
    %v187 = vadd.f32 %v61, %v186
    %188 = vdwg.mxu0
    %v189 = vmax.f32 %v150, 0.0
    %v190 = vmax.f32 %v152, 0.0
    %v191 = vmax.f32 %v155, 0.0
    %v192 = vmax.f32 %v157, 0.0
    %v193 = vmax.f32 %v160, 0.0
    %v194 = vmax.f32 %v162, 0.0
    %v195 = vmax.f32 %v165, 0.0
    %v196 = vmax.f32 %v167, 0.0
    %v197 = vmax.f32 %v170, 0.0
    %v198 = vmax.f32 %v172, 0.0
    %v199 = vmax.f32 %v175, 0.0
    %v200 = vmax.f32 %v177, 0.0
    %v201 = vmax.f32 %v180, 0.0
    %v202 = vmax.f32 %v182, 0.0
    %v203 = vmax.f32 %v185, 0.0
    %v204 = vmax.f32 %v187, 0.0
    %v205 = vpack.c.bf16 %v190, %v189
    %v206 = vpack.c.bf16 %v192, %v191
    %v207 = vpack.c.bf16 %v194, %v193
    %v208 = vpack.c.bf16 %v196, %v195
    %v209 = vpack.c.bf16 %v198, %v197
    %v210 = vpack.c.bf16 %v200, %v199
    %v211 = vpack.c.bf16 %v202, %v201
    %v212 = vpack.c.bf16 %v204, %v203
    %v213 = vld [vmem:[%s3] sm:$0xf]
    %v214 = vld [vmem:[%s3 + $0x4] sm:$0xf]
    %v215 = vld [vmem:[%s3 + $0x8] sm:$0xf]
    %v216 = vld [vmem:[%s3 + $0xc] sm:$0xf]
    %v217 = vld [vmem:[%s4] sm:$0x1]
    %v219 = vperm.slane %v217, 0
    %v225 = vunpack.c.l.b16 %v213
    %v226 = vunpack.c.l.b16 %v214
    %v227 = vunpack.c.l.b16 %v215
    %v228 = vunpack.c.l.b16 %v216
    %v229 = vpack.c.b16 %v226, %v225
    %v230 = vpack.c.b16 %v228, %v227
    %v234 = vsel %vm115, %v205, 0
    %v237 = vsel %vm115, %v206, 0
    %v240 = vsel %vm115, %v207, 0
    %v243 = vsel %vm115, %v208, 0
    %v246 = vsel %vm115, %v209, 0
    %v249 = vsel %vm115, %v210, 0
    %v252 = vsel %vm115, %v211, 0
    %v255 = vsel %vm115, %v212, 0
    %257 = vmatpush.bf16.msra.mxu0 0
    %258 = vmatpush.bf16.msra.mxu0 0
    %259 = vmatpush.bf16.msra.mxu0 0
    %260 = vmatpush.bf16.msra.mxu0 0
    %261 = vmatpush.bf16.msra.mxu0 0
    %262 = vmatpush.bf16.msra.mxu0 0
    %263 = vmatpush.bf16.msra.mxu0 %v230
    %264 = vmatpush.bf16.msra.mxu0 %v229
    %265 = vmatmul.bf16.gmra.mxu0 %v234
    %v266 = vpop.f32.mrf.mxu0
    %v267 = vadd.f32 %v219, %v266
    %v268 = vpop.f32.mrf.mxu0
    %v269 = vadd.f32 %v219, %v268
    %270 = vmatmul.bf16.gmra.mxu0 %v237
    %v271 = vpop.f32.mrf.mxu0
    %v272 = vadd.f32 %v219, %v271
    %v273 = vpop.f32.mrf.mxu0
    %v274 = vadd.f32 %v219, %v273
    %275 = vmatmul.bf16.gmra.mxu0 %v240
    %v276 = vpop.f32.mrf.mxu0
    %v277 = vadd.f32 %v219, %v276
    %v278 = vpop.f32.mrf.mxu0
    %v279 = vadd.f32 %v219, %v278
    %280 = vmatmul.bf16.gmra.mxu0 %v243
    %v281 = vpop.f32.mrf.mxu0
    %v282 = vadd.f32 %v219, %v281
    %v283 = vpop.f32.mrf.mxu0
    %v284 = vadd.f32 %v219, %v283
    %285 = vmatmul.bf16.gmra.mxu0 %v246
    %v286 = vpop.f32.mrf.mxu0
    %v287 = vadd.f32 %v219, %v286
    %v288 = vpop.f32.mrf.mxu0
    %v289 = vadd.f32 %v219, %v288
    %290 = vmatmul.bf16.gmra.mxu0 %v249
    %v291 = vpop.f32.mrf.mxu0
    %v292 = vadd.f32 %v219, %v291
    %v293 = vpop.f32.mrf.mxu0
    %v294 = vadd.f32 %v219, %v293
    %295 = vmatmul.bf16.gmra.mxu0 %v252
    %v296 = vpop.f32.mrf.mxu0
    %v297 = vadd.f32 %v219, %v296
    %v298 = vpop.f32.mrf.mxu0
    %v299 = vadd.f32 %v219, %v298
    %300 = vmatmul.bf16.gmra.mxu0 %v255
    %v301 = vpop.f32.mrf.mxu0
    %v302 = vadd.f32 %v219, %v301
    %v303 = vpop.f32.mrf.mxu0
    %v304 = vadd.f32 %v219, %v303
    %305 = vdwg.mxu0
    %v306 = vmax.f32 %v267, 0.0
    %v307 = vmax.f32 %v269, 0.0
    %v308 = vmax.f32 %v272, 0.0
    %v309 = vmax.f32 %v274, 0.0
    %v310 = vmax.f32 %v277, 0.0
    %v311 = vmax.f32 %v279, 0.0
    %v312 = vmax.f32 %v282, 0.0
    %v313 = vmax.f32 %v284, 0.0
    %v314 = vmax.f32 %v287, 0.0
    %v315 = vmax.f32 %v289, 0.0
    %v316 = vmax.f32 %v292, 0.0
    %v317 = vmax.f32 %v294, 0.0
    %v318 = vmax.f32 %v297, 0.0
    %v319 = vmax.f32 %v299, 0.0
    %v320 = vmax.f32 %v302, 0.0
    %v321 = vmax.f32 %v304, 0.0
    %v322 = vpack.c.bf16 %v307, %v306
    %v323 = vpack.c.bf16 %v309, %v308
    %v324 = vpack.c.bf16 %v311, %v310
    %v325 = vpack.c.bf16 %v313, %v312
    %v326 = vpack.c.bf16 %v315, %v314
    %v327 = vpack.c.bf16 %v317, %v316
    %v328 = vpack.c.bf16 %v319, %v318
    %v329 = vpack.c.bf16 %v321, %v320
    %v330 = vld [vmem:[%s5] sm:$0xf]
    %v331 = vld [vmem:[%s5 + $0x4] sm:$0xf]
    %v332 = vld [vmem:[%s5 + $0x8] sm:$0xf]
    %v333 = vld [vmem:[%s5 + $0xc] sm:$0xf]
    %v334 = vld [vmem:[%s6] sm:$0x1]
    %v336 = vperm.slane %v334, 0
    %v342 = vunpack.c.l.b16 %v330
    %v343 = vunpack.c.l.b16 %v331
    %v344 = vunpack.c.l.b16 %v332
    %v345 = vunpack.c.l.b16 %v333
    %v346 = vpack.c.b16 %v343, %v342
    %v347 = vpack.c.b16 %v345, %v344
    %v351 = vsel %vm115, %v322, 0
    %v354 = vsel %vm115, %v323, 0
    %v357 = vsel %vm115, %v324, 0
    %v360 = vsel %vm115, %v325, 0
    %v363 = vsel %vm115, %v326, 0
    %v366 = vsel %vm115, %v327, 0
    %v369 = vsel %vm115, %v328, 0
    %v372 = vsel %vm115, %v329, 0
    %374 = vmatpush.bf16.msra.mxu0 0
    %375 = vmatpush.bf16.msra.mxu0 0
    %376 = vmatpush.bf16.msra.mxu0 0
    %377 = vmatpush.bf16.msra.mxu0 0
    %378 = vmatpush.bf16.msra.mxu0 0
    %379 = vmatpush.bf16.msra.mxu0 0
    %380 = vmatpush.bf16.msra.mxu0 %v347
    %381 = vmatpush.bf16.msra.mxu0 %v346
    %382 = vmatmul.bf16.gmra.mxu0 %v351
    %v383 = vpop.f32.mrf.mxu0
    %v384 = vadd.f32 %v336, %v383
    %v385 = vpop.f32.mrf.mxu0
    %v386 = vadd.f32 %v336, %v385
    %387 = vmatmul.bf16.gmra.mxu0 %v354
    %v388 = vpop.f32.mrf.mxu0
    %v389 = vadd.f32 %v336, %v388
    %v390 = vpop.f32.mrf.mxu0
    %v391 = vadd.f32 %v336, %v390
    %392 = vmatmul.bf16.gmra.mxu0 %v357
    %v393 = vpop.f32.mrf.mxu0
    %v394 = vadd.f32 %v336, %v393
    %v395 = vpop.f32.mrf.mxu0
    %v396 = vadd.f32 %v336, %v395
    %397 = vmatmul.bf16.gmra.mxu0 %v360
    %v398 = vpop.f32.mrf.mxu0
    %v399 = vadd.f32 %v336, %v398
    %v400 = vpop.f32.mrf.mxu0
    %v401 = vadd.f32 %v336, %v400
    %402 = vmatmul.bf16.gmra.mxu0 %v363
    %v403 = vpop.f32.mrf.mxu0
    %v404 = vadd.f32 %v336, %v403
    %v405 = vpop.f32.mrf.mxu0
    %v406 = vadd.f32 %v336, %v405
    %407 = vmatmul.bf16.gmra.mxu0 %v366
    %v408 = vpop.f32.mrf.mxu0
    %v409 = vadd.f32 %v336, %v408
    %v410 = vpop.f32.mrf.mxu0
    %v411 = vadd.f32 %v336, %v410
    %412 = vmatmul.bf16.gmra.mxu0 %v369
    %v413 = vpop.f32.mrf.mxu0
    %v414 = vadd.f32 %v336, %v413
    %v415 = vpop.f32.mrf.mxu0
    %v416 = vadd.f32 %v336, %v415
    %417 = vmatmul.bf16.gmra.mxu0 %v372
    %v418 = vpop.f32.mrf.mxu0
    %v419 = vadd.f32 %v336, %v418
    %v420 = vpop.f32.mrf.mxu0
    %v421 = vadd.f32 %v336, %v420
    %422 = vdwg.mxu0
    %v423 = vpack.c.bf16 %v386, %v384
    %v424 = vpack.c.bf16 %v391, %v389
    %v425 = vpack.c.bf16 %v396, %v394
    %v426 = vpack.c.bf16 %v401, %v399
    %v427 = vpack.c.bf16 %v406, %v404
    %v428 = vpack.c.bf16 %v411, %v409
    %v429 = vpack.c.bf16 %v416, %v414
    %v430 = vpack.c.bf16 %v421, %v419
    %v431 = vld [vmem:[%s7] sm:$0xf]
    %v432 = vld [vmem:[%s7 + $0x4] sm:$0xf]
    %v433 = vld [vmem:[%s7 + $0x8] sm:$0xf]
    %v434 = vld [vmem:[%s7 + $0xc] sm:$0xf]
    %v435 = vld [vmem:[%s8] sm:$0x1]
    %v437 = vperm.slane %v435, 0
    %v443 = vunpack.c.l.b16 %v431
    %v444 = vunpack.c.l.b16 %v432
    %v445 = vunpack.c.l.b16 %v433
    %v446 = vunpack.c.l.b16 %v434
    %v447 = vpack.c.b16 %v444, %v443
    %v448 = vpack.c.b16 %v446, %v445
    %v452 = vsel %vm115, %v423, 0
    %v455 = vsel %vm115, %v424, 0
    %v458 = vsel %vm115, %v425, 0
    %v461 = vsel %vm115, %v426, 0
    %v464 = vsel %vm115, %v427, 0
    %v467 = vsel %vm115, %v428, 0
    %v470 = vsel %vm115, %v429, 0
    %v473 = vsel %vm115, %v430, 0
    %475 = vmatpush.bf16.msra.mxu0 0
    %476 = vmatpush.bf16.msra.mxu0 0
    %477 = vmatpush.bf16.msra.mxu0 0
    %478 = vmatpush.bf16.msra.mxu0 0
    %479 = vmatpush.bf16.msra.mxu0 0
    %480 = vmatpush.bf16.msra.mxu0 0
    %481 = vmatpush.bf16.msra.mxu0 %v448
    %482 = vmatpush.bf16.msra.mxu0 %v447
    %483 = vmatmul.bf16.gmra.mxu0 %v452
    %v484 = vpop.f32.mrf.mxu0
    %v485 = vadd.f32 %v437, %v484
    %v486 = vpop.f32.mrf.mxu0
    %v487 = vadd.f32 %v437, %v486
    %488 = vmatmul.bf16.gmra.mxu0 %v455
    %v489 = vpop.f32.mrf.mxu0
    %v490 = vadd.f32 %v437, %v489
    %v491 = vpop.f32.mrf.mxu0
    %v492 = vadd.f32 %v437, %v491
    %493 = vmatmul.bf16.gmra.mxu0 %v458
    %v494 = vpop.f32.mrf.mxu0
    %v495 = vadd.f32 %v437, %v494
    %v496 = vpop.f32.mrf.mxu0
    %v497 = vadd.f32 %v437, %v496
    %498 = vmatmul.bf16.gmra.mxu0 %v461
    %v499 = vpop.f32.mrf.mxu0
    %v500 = vadd.f32 %v437, %v499
    %v501 = vpop.f32.mrf.mxu0
    %v502 = vadd.f32 %v437, %v501
    %503 = vmatmul.bf16.gmra.mxu0 %v464
    %v504 = vpop.f32.mrf.mxu0
    %v505 = vadd.f32 %v437, %v504
    %v506 = vpop.f32.mrf.mxu0
    %v507 = vadd.f32 %v437, %v506
    %508 = vmatmul.bf16.gmra.mxu0 %v467
    %v509 = vpop.f32.mrf.mxu0
    %v510 = vadd.f32 %v437, %v509
    %v511 = vpop.f32.mrf.mxu0
    %v512 = vadd.f32 %v437, %v511
    %513 = vmatmul.bf16.gmra.mxu0 %v470
    %v514 = vpop.f32.mrf.mxu0
    %v515 = vadd.f32 %v437, %v514
    %v516 = vpop.f32.mrf.mxu0
    %v517 = vadd.f32 %v437, %v516
    %518 = vmatmul.bf16.gmra.mxu0 %v473
    %v519 = vpop.f32.mrf.mxu0
    %v520 = vadd.f32 %v437, %v519
    %v521 = vpop.f32.mrf.mxu0
    %v522 = vadd.f32 %v437, %v521
    %523 = vdwg.mxu0
    %v524 = vmax.f32 %v485, 0.0
    %v525 = vmax.f32 %v487, 0.0
    %v526 = vmax.f32 %v490, 0.0
    %v527 = vmax.f32 %v492, 0.0
    %v528 = vmax.f32 %v495, 0.0
    %v529 = vmax.f32 %v497, 0.0
    %v530 = vmax.f32 %v500, 0.0
    %v531 = vmax.f32 %v502, 0.0
    %v532 = vmax.f32 %v505, 0.0
    %v533 = vmax.f32 %v507, 0.0
    %v534 = vmax.f32 %v510, 0.0
    %v535 = vmax.f32 %v512, 0.0
    %v536 = vmax.f32 %v515, 0.0
    %v537 = vmax.f32 %v517, 0.0
    %v538 = vmax.f32 %v520, 0.0
    %v539 = vmax.f32 %v522, 0.0
    %v540 = vpack.c.bf16 %v525, %v524
    %v541 = vpack.c.bf16 %v527, %v526
    %v542 = vpack.c.bf16 %v529, %v528
    %v543 = vpack.c.bf16 %v531, %v530
    %v544 = vpack.c.bf16 %v533, %v532
    %v545 = vpack.c.bf16 %v535, %v534
    %v546 = vpack.c.bf16 %v537, %v536
    %v547 = vpack.c.bf16 %v539, %v538
    %v548 = vld [vmem:[%s9] sm:$0xf]
    %v549 = vld [vmem:[%s9 + $0x4] sm:$0xf]
    %v550 = vld [vmem:[%s9 + $0x8] sm:$0xf]
    %v551 = vld [vmem:[%s9 + $0xc] sm:$0xf]
    %v552 = vld [vmem:[%s9 + $0x10] sm:$0xf]
    %v553 = vld [vmem:[%s9 + $0x14] sm:$0xf]
    %v554 = vld [vmem:[%s9 + $0x18] sm:$0xf]
    %v555 = vld [vmem:[%s9 + $0x1c] sm:$0xf]
    %v556 = vld [vmem:[%s10] sm:$0x1]
    %v558 = vperm.slane %v556, 0
    %v568 = vunpack.c.l.b16 %v548
    %v569 = vunpack.c.l.b16 %v549
    %v570 = vunpack.c.l.b16 %v550
    %v571 = vunpack.c.l.b16 %v551
    %v572 = vunpack.c.l.b16 %v552
    %v573 = vunpack.c.l.b16 %v553
    %v574 = vunpack.c.l.b16 %v554
    %v575 = vunpack.c.l.b16 %v555
    %v576 = vpack.c.b16 %v569, %v568
    %v577 = vpack.c.b16 %v571, %v570
    %v578 = vpack.c.b16 %v573, %v572
    %v579 = vpack.c.b16 %v575, %v574
    %vm584 = vcmask 523264
    %v586 = vsel %vm584, %v540, 0
    %v589 = vsel %vm584, %v541, 0
    %v592 = vsel %vm584, %v542, 0
    %v595 = vsel %vm584, %v543, 0
    %v598 = vsel %vm584, %v544, 0
    %v601 = vsel %vm584, %v545, 0
    %v604 = vsel %vm584, %v546, 0
    %v607 = vsel %vm584, %v547, 0
    %609 = vmatpush.bf16.msra.mxu0 0
    %610 = vmatpush.bf16.msra.mxu0 0
    %611 = vmatpush.bf16.msra.mxu0 0
    %612 = vmatpush.bf16.msra.mxu0 0
    %613 = vmatpush.bf16.msra.mxu0 %v579
    %614 = vmatpush.bf16.msra.mxu0 %v578
    %615 = vmatpush.bf16.msra.mxu0 %v577
    %616 = vmatpush.bf16.msra.mxu0 %v576
    %617 = vmatmul.bf16.gmra.mxu0 %v586
    %v618 = vpop.f32.mrf.mxu0
    %v619 = vadd.f32 %v558, %v618
    %v620 = vpop.f32.mrf.mxu0
    %v621 = vadd.f32 %v558, %v620
    %622 = vmatmul.bf16.gmra.mxu0 %v589
    %v623 = vpop.f32.mrf.mxu0
    %v624 = vadd.f32 %v558, %v623
    %v625 = vpop.f32.mrf.mxu0
    %v626 = vadd.f32 %v558, %v625
    %627 = vmatmul.bf16.gmra.mxu0 %v592
    %v628 = vpop.f32.mrf.mxu0
    %v629 = vadd.f32 %v558, %v628
    %v630 = vpop.f32.mrf.mxu0
    %v631 = vadd.f32 %v558, %v630
    %632 = vmatmul.bf16.gmra.mxu0 %v595
    %v633 = vpop.f32.mrf.mxu0
    %v634 = vadd.f32 %v558, %v633
    %v635 = vpop.f32.mrf.mxu0
    %v636 = vadd.f32 %v558, %v635
    %637 = vmatmul.bf16.gmra.mxu0 %v598
    %v638 = vpop.f32.mrf.mxu0
    %v639 = vadd.f32 %v558, %v638
    %v640 = vpop.f32.mrf.mxu0
    %v641 = vadd.f32 %v558, %v640
    %642 = vmatmul.bf16.gmra.mxu0 %v601
    %v643 = vpop.f32.mrf.mxu0
    %v644 = vadd.f32 %v558, %v643
    %v645 = vpop.f32.mrf.mxu0
    %v646 = vadd.f32 %v558, %v645
    %647 = vmatmul.bf16.gmra.mxu0 %v604
    %v648 = vpop.f32.mrf.mxu0
    %v649 = vadd.f32 %v558, %v648
    %v650 = vpop.f32.mrf.mxu0
    %v651 = vadd.f32 %v558, %v650
    %652 = vmatmul.bf16.gmra.mxu0 %v607
    %v653 = vpop.f32.mrf.mxu0
    %v654 = vadd.f32 %v558, %v653
    %v655 = vpop.f32.mrf.mxu0
    %v656 = vadd.f32 %v558, %v655
    %657 = vdwg.mxu0
    %658 = vst [vmem:[#allocation2] sm:$0xff] %v619
    %659 = vst [vmem:[#allocation2 + $0x8] sm:$0xff] %v621
    %660 = vst [vmem:[#allocation2 + $0x10] sm:$0xff] %v624
    %661 = vst [vmem:[#allocation2 + $0x18] sm:$0xff] %v626
    %662 = vst [vmem:[#allocation2 + $0x20] sm:$0xff] %v629
    %663 = vst [vmem:[#allocation2 + $0x28] sm:$0xff] %v631
    %664 = vst [vmem:[#allocation2 + $0x30] sm:$0xff] %v634
    %665 = vst [vmem:[#allocation2 + $0x38] sm:$0xff] %v636
    %666 = vst [vmem:[#allocation2 + $0x40] sm:$0xff] %v639
    %667 = vst [vmem:[#allocation2 + $0x48] sm:$0xff] %v641
    %668 = vst [vmem:[#allocation2 + $0x50] sm:$0xff] %v644
    %669 = vst [vmem:[#allocation2 + $0x58] sm:$0xff] %v646
    %670 = vst [vmem:[#allocation2 + $0x60] sm:$0xff] %v649
    %671 = vst [vmem:[#allocation2 + $0x68] sm:$0xff] %v651
    %672 = vst [vmem:[#allocation2 + $0x70] sm:$0xff] %v654
    %673 = vst [vmem:[#allocation2 + $0x78] sm:$0xff] %v656
    // Predicated region
    $region46: #{discrete_actor_critic_forward.1} parent=1 // pred_check
      _
    $region47: #{discrete_actor_critic_forward.1} parent=1 // pred_check_branch
      %675 = sbr.rel (0) target = $region49
    $region48: #{discrete_actor_critic_forward.1} parent=1 // pred_region
      // Predicated region
      $region50: #{discrete_actor_critic_forward.1} parent=48 // pred_check
        _
      $region51: #{discrete_actor_critic_forward.1} parent=48 // pred_check_branch
        %677 = sbr.rel (0) target = $region53
      $region52: #{discrete_actor_critic_forward.1} parent=48 // pred_region
        // Predicated region
        $region54: #{discrete_actor_critic_forward.1} parent=52 // pred_check
          _
        $region55: #{discrete_actor_critic_forward.1} parent=52 // pred_check_branch
          %679 = sbr.rel (0) target = $region57
        $region56: #{discrete_actor_critic_forward.1} parent=52 // pred_region
          // Predicated region
          $region69: #{discrete_actor_critic_forward.1} parent=56 // pred_check
            _
          $region70: #{discrete_actor_critic_forward.1} parent=56 // pred_check_branch
            %695 = sbr.rel (0) target = $region72
          $region71: #{discrete_actor_critic_forward.1} parent=56 // pred_region
            loop: start=0, step=1, limit=1
            $region73: #{discrete_actor_critic_forward.1} parent=71 // loop_pre_header
              _
            $region74: #{discrete_actor_critic_forward.1} parent=71 // loop_header
              %s697 = sphi 0, %s701
              %p698 = scmp.ge.s32.totalorder %s697, 1
              %s702 = sphi [#allocation2], [#allocation2]
              %s703 = sphi %s11, %s11
            $region75: #{discrete_actor_critic_forward.1} parent=71 // loop_header_branch
              %700 = sbr.rel (%p698) target = $region79
            $region76: #{discrete_actor_critic_forward.1} parent=71 // loop_body
              %v704 = vld [vmem:[%s702] sm:$0xff]
              %705 = vst [vmem:[%s703] sm:$0xff] %v704
            $region77: #{discrete_actor_critic_forward.1} parent=71 // loop_footer
              %s701 = sadd.s32 1, %s697
            $region78: #{discrete_actor_critic_forward.1} parent=71 // loop_footer_branch
              %696 = sbr.rel target = $region74
            $region79: #{discrete_actor_critic_forward.1} parent=71 // loop_exit
              _
          $region72: #{discrete_actor_critic_forward.1} parent=56 // pred_fallthru
            _
          // Predicated region
          $region80: #{discrete_actor_critic_forward.1} parent=56 // pred_check
            _
          $region81: #{discrete_actor_critic_forward.1} parent=56 // pred_check_branch
            %707 = sbr.rel target = $region83
          $region82: #{discrete_actor_critic_forward.1} parent=56 // pred_region
            _
          $region83: #{discrete_actor_critic_forward.1} parent=56 // pred_fallthru
            _
        $region57: #{discrete_actor_critic_forward.1} parent=52 // pred_fallthru
          _
        // Predicated region
        $region58: #{discrete_actor_critic_forward.1} parent=52 // pred_check
          _
        $region59: #{discrete_actor_critic_forward.1} parent=52 // pred_check_branch
          %681 = sbr.rel target = $region61
        $region60: #{discrete_actor_critic_forward.1} parent=52 // pred_region
          %s683 = ssub.s32 256, 1
          loop: start=0, step=1, limit=1
          $region62: #{discrete_actor_critic_forward.1} parent=60 // loop_pre_header
            _
          $region63: #{discrete_actor_critic_forward.1} parent=60 // loop_header
            %s685 = sphi 0, %s689
            %p686 = scmp.ge.s32.totalorder %s685, 1
            %s690 = sphi [#allocation2], [#allocation2]
            %s691 = sphi %s11, %s11
          $region64: #{discrete_actor_critic_forward.1} parent=60 // loop_header_branch
            %688 = sbr.rel (%p686) target = $region68
          $region65: #{discrete_actor_critic_forward.1} parent=60 // loop_body
            %v692 = vld [vmem:[%s690] sm:%s683]
            %693 = vst [vmem:[%s691] sm:%s683] %v692
          $region66: #{discrete_actor_critic_forward.1} parent=60 // loop_footer
            %s689 = sadd.s32 1, %s685
          $region67: #{discrete_actor_critic_forward.1} parent=60 // loop_footer_branch
            %684 = sbr.rel target = $region63
          $region68: #{discrete_actor_critic_forward.1} parent=60 // loop_exit
            _
        $region61: #{discrete_actor_critic_forward.1} parent=52 // pred_fallthru
          _
      $region53: #{discrete_actor_critic_forward.1} parent=48 // pred_fallthru
        _
      %708 = vnop
    $region49: #{discrete_actor_critic_forward.1} parent=1 // pred_fallthru
      _
    // Predicated region
    $region84: #{discrete_actor_critic_forward.1} parent=1 // pred_check
      _
    $region85: #{discrete_actor_critic_forward.1} parent=1 // pred_check_branch
      %710 = sbr.rel (0) target = $region87
    $region86: #{discrete_actor_critic_forward.1} parent=1 // pred_region
      _
    $region87: #{discrete_actor_critic_forward.1} parent=1 // pred_fallthru
      _

</llo_original>
